<compile_context>
chip_gen: v7x
topology: tpu7x:2x2x1
jax: 0.10.0
libtpu: 0.0.40
codegen_flags: <defaults>
</compile_context>

<pallas_src>
import functools

import jax
import jax.numpy as jnp
from jax.experimental import pallas as pl
from jax.experimental.pallas import tpu as pltpu


def _trend_kernel(xt_ref, w1_ref, b1_ref, w2_ref, b2_ref, w3_ref, b3_ref,
                  w4_ref, b4_ref, y_ref, patches_buf, *,
                  batch_block, n_vars, num_patches, patch_len, stride):
    P = n_vars * num_patches
    bb = batch_block

    # ---- Fused unfold: assemble (P*bb, patch_len) patch rows in VMEM. ------
    # Row order is (patch, var)-major / batch-minor. The MLP below is row-wise
    # independent and the per-batch mean sums whole (patch, var) chunks, so
    # this is semantically identical to the reference (b, v, p) ordering.
    for p in range(num_patches):
        lo = p * stride
        for v in range(n_vars):
            c = p * n_vars + v
            patches_buf[c * bb:(c + 1) * bb, :] = xt_ref[v, :, lo:lo + patch_len]
    x_rows = patches_buf[...]                        # (P*bb, patch_len) bf16

    # ---- MLP: bf16 MXU operands, f32 accumulation, f32 bias/ReLU on VPU. ---
    h = jnp.dot(x_rows, w1_ref[...], preferred_element_type=jnp.float32)
    h = jnp.maximum(h + b1_ref[...], 0.0)
    h = jnp.dot(h.astype(jnp.bfloat16), w2_ref[...],
                preferred_element_type=jnp.float32)
    h = jnp.maximum(h + b2_ref[...], 0.0)
    h = jnp.dot(h.astype(jnp.bfloat16), w3_ref[...],
                preferred_element_type=jnp.float32)
    h = jnp.maximum(h + b3_ref[...], 0.0)            # (P*bb, d_model) f32

    # ---- Per-batch mean: unrolled sum of P contiguous (bb, d_model) chunks
    # (no pooling matrix -> no O(bb^2 * P) MXU/VMEM blow-up); 1/P folded in. --
    m = h[0:bb, :]
    for c in range(1, P):
        m = m + h[c * bb:(c + 1) * bb, :]
    m = m * (1.0 / P)                                 # (bb, d_model) f32

    # ---- predict: one (bb, d_model) @ (d_model, patch_len) matmul. ---------
    y_ref[...] = jnp.dot(m.astype(jnp.bfloat16), w4_ref[...],
                         preferred_element_type=jnp.float32) + b4_ref[...]


def _pick_batch_block(B, P):
    """Largest batch_block that (a) divides B into >= 2 blocks, (b) is a
    multiple of 8 (so split blocks satisfy the (8,128) rule on the batch
    dimension), and (c) keeps <= ~2048 patch rows per block (a few MiB of
    VMEM per block, well under v7x's 32 MiB scoped / 64 MiB physical budget,
    while leaving >= 2 blocks for DMA/compute overlap and v7x 2-TC sharding).
    Falls back to a single full block for small B."""
    best = B
    for bb in range(8, B // 2 + 1, 8):
        if B % bb == 0 and bb * P <= 2048:
            best = bb
    return best


def trend_model_forward(x, params, patch_len, stride, batch_block=None):
    """x: (B, seq_len, n_vars) float32 -> (B, patch_len) float32."""
    B, seq_len, n_vars = x.shape
    num_patches = (seq_len - patch_len) // stride + 1
    P = n_vars * num_patches

    if batch_block is None:
        batch_block = _pick_batch_block(B, P)
    assert B % batch_block == 0
    n_blocks = B // batch_block
    assert n_blocks == 1 or batch_block % 8 == 0     # (8,128) rule when split

    w1, b1, w2, b2, w3, b3, w4, b4 = params
    d_model = w1.shape[1]

    # Only layout plumbing left in XLA: one transpose the size of x (the
    # unfold itself is fused into the kernel). bf16 stream for all MXU
    # operands; biases stay f32.
    xt = jnp.transpose(x, (2, 0, 1)).astype(jnp.bfloat16)   # (n_vars, B, seq)
    w1, w2, w3, w4 = (w.astype(jnp.bfloat16) for w in (w1, w2, w3, w4))
    b1, b2, b3, b4 = (b.astype(jnp.float32) for b in (b1, b2, b3, b4))

    # Grid-invariant weights/biases: single-buffer them when the grid is
    # split (default pipelining would double-buffer them and waste VMEM).
    wkw = {"pipeline_mode": pl.Buffered(1)} if n_blocks > 1 else {}

    def wspec(shape):
        return pl.BlockSpec(shape, lambda i: tuple(0 for _ in shape), **wkw)

    kernel = functools.partial(
        _trend_kernel, batch_block=batch_block, n_vars=n_vars,
        num_patches=num_patches, patch_len=patch_len, stride=stride)

    y = pl.pallas_call(
        kernel,
        out_shape=jax.ShapeDtypeStruct((B, patch_len), jnp.float32),
        grid_spec=pltpu.PrefetchScalarGridSpec(
            num_scalar_prefetch=0,
            grid=(n_blocks,),
            in_specs=[
                pl.BlockSpec((n_vars, batch_block, seq_len),
                             lambda i: (0, i, 0)),                   # x (transposed)
                wspec((patch_len, d_model)), wspec((1, d_model)),    # W1, b1
                wspec((d_model, d_model)),   wspec((1, d_model)),    # W2, b2
                wspec((d_model, d_model)),   wspec((1, d_model)),    # W3, b3
                wspec((d_model, patch_len)), wspec((1, patch_len)),  # W4, b4
            ],
            out_specs=pl.BlockSpec((batch_block, patch_len), lambda i: (i, 0)),
            scratch_shapes=[
                pltpu.VMEM((P * batch_block, patch_len), jnp.bfloat16)],
        ),
        compiler_params=pltpu.CompilerParams(
            dimension_semantics=("parallel",)),
    )(xt, w1, b1, w2, b2, w3, b3, w4, b4)
    return y


def init_params(key, patch_len, d_model):
    """Deterministic synthetic params; Linear weights stored as (in, out)."""
    ks = jax.random.split(key, 8)
    scale = 0.05
    w1 = jax.random.normal(ks[0], (patch_len, d_model), jnp.float32) * scale
    b1 = jax.random.normal(ks[1], (1, d_model), jnp.float32) * scale
    w2 = jax.random.normal(ks[2], (d_model, d_model), jnp.float32) * scale
    b2 = jax.random.normal(ks[3], (1, d_model), jnp.float32) * scale
    w3 = jax.random.normal(ks[4], (d_model, d_model), jnp.float32) * scale
    b3 = jax.random.normal(ks[5], (1, d_model), jnp.float32) * scale
    w4 = jax.random.normal(ks[6], (d_model, patch_len), jnp.float32) * scale
    b4 = jax.random.normal(ks[7], (1, patch_len), jnp.float32) * scale
    return (w1, b1, w2, b2, w3, b3, w4, b4)


def reference_forward(x, params, patch_len, stride):
    """Pure-JAX (f32) replica of the PyTorch forward (eval mode)."""
    B, seq_len, n_vars = x.shape
    num_patches = (seq_len - patch_len) // stride + 1
    x_perm = jnp.transpose(x, (0, 2, 1))
    idx = jnp.arange(num_patches)[:, None] * stride + jnp.arange(patch_len)[None, :]
    p = x_perm[:, :, idx].reshape(B * n_vars * num_patches, patch_len)
    w1, b1, w2, b2, w3, b3, w4, b4 = params
    h = jnp.maximum(p @ w1 + b1, 0.0)
    h = jnp.maximum(h @ w2 + b2, 0.0)
    h = jnp.maximum(h @ w3 + b3, 0.0)
    h = h.reshape(B, n_vars * num_patches, -1).mean(axis=1)
    return h @ w4 + b4


if __name__ == "__main__":
    # Small shapes consistent with the module.
    B, seq_len, n_vars = 2, 16, 4
    patch_len, stride, d_model = 8, 4, 32
    # NOTE: Dropout layers are identity at inference; no randomness applied.

    key = jax.random.PRNGKey(0)
    kx, kp = jax.random.split(key)
    x = jax.random.normal(kx, (B, seq_len, n_vars), jnp.float32)
    params = init_params(kp, patch_len, d_model)

    y = trend_model_forward(x, params, patch_len, stride)
    y = jax.block_until_ready(y)

    y_ref = reference_forward(x, params, patch_len, stride)
    assert y.shape == (B, patch_len)
    # bf16 MXU operands vs the pure-f32 reference: loose-but-meaningful check.
    assert jnp.allclose(y, y_ref, atol=5e-3, rtol=5e-2), \
        float(jnp.max(jnp.abs(y - y_ref)))

    print("KERNEL_OK")
</pallas_src>

<mosaic_0001>
module attributes {stable_mosaic.version = 11 : i64} {
  func.func @_trend_kernel(%arg0: i32, %arg1: memref<4x2x16xbf16, #tpu.memory_space<vmem>>, %arg2: memref<8x32xbf16, #tpu.memory_space<vmem>>, %arg3: memref<1x32xf32, #tpu.memory_space<vmem>>, %arg4: memref<32x32xbf16, #tpu.memory_space<vmem>>, %arg5: memref<1x32xf32, #tpu.memory_space<vmem>>, %arg6: memref<32x32xbf16, #tpu.memory_space<vmem>>, %arg7: memref<1x32xf32, #tpu.memory_space<vmem>>, %arg8: memref<32x8xbf16, #tpu.memory_space<vmem>>, %arg9: memref<1x8xf32, #tpu.memory_space<vmem>>, %arg10: memref<2x8xf32, #tpu.memory_space<vmem>>, %arg11: memref<24x8xbf16, #tpu.memory_space<vmem>>) attributes {dimension_semantics = [#tpu.dimension_semantics<parallel>], iteration_bounds = array<i64: 1>, scalar_prefetch = 0 : i64, scratch_operands = 1 : i64, tpu.core_type = #tpu.core_type<tc>, window_params = [{transform_indices = @transform_0, window_bounds = array<i64: 4, 2, 16>}, {pipeline_mode = #tpu.pipeline_mode<synchronous>, transform_indices = @transform_1, window_bounds = array<i64: 8, 32>}, {pipeline_mode = #tpu.pipeline_mode<synchronous>, transform_indices = @transform_2, window_bounds = array<i64: 1, 32>}, {pipeline_mode = #tpu.pipeline_mode<synchronous>, transform_indices = @transform_3, window_bounds = array<i64: 32, 32>}, {pipeline_mode = #tpu.pipeline_mode<synchronous>, transform_indices = @transform_4, window_bounds = array<i64: 1, 32>}, {pipeline_mode = #tpu.pipeline_mode<synchronous>, transform_indices = @transform_5, window_bounds = array<i64: 32, 32>}, {pipeline_mode = #tpu.pipeline_mode<synchronous>, transform_indices = @transform_6, window_bounds = array<i64: 1, 32>}, {pipeline_mode = #tpu.pipeline_mode<synchronous>, transform_indices = @transform_7, window_bounds = array<i64: 32, 8>}, {pipeline_mode = #tpu.pipeline_mode<synchronous>, transform_indices = @transform_8, window_bounds = array<i64: 1, 8>}, {transform_indices = @transform_9, window_bounds = array<i64: 2, 8>}]} {
    %c0 = arith.constant 0 : index
    %c0_0 = arith.constant 0 : index
    %c0_1 = arith.constant 0 : index
    %0 = vector.load %arg1[%c0, %c0_0, %c0_1] : memref<4x2x16xbf16, #tpu.memory_space<vmem>>, vector<1x2x8xbf16>
    %1 = vector.shape_cast %0 : vector<1x2x8xbf16> to vector<2x8xbf16>
    %c0_2 = arith.constant 0 : index
    %c0_3 = arith.constant 0 : index
    %2 = vector.load %arg11[%c0_2, %c0_3] : memref<24x8xbf16, #tpu.memory_space<vmem>>, vector<2x8xbf16>
    tpu.vector_store %arg11[%c0_2, %c0_3], %1 {strides = array<i32>} : memref<24x8xbf16, #tpu.memory_space<vmem>>, vector<2x8xbf16>,
    %c1 = arith.constant 1 : index
    %c0_4 = arith.constant 0 : index
    %c0_5 = arith.constant 0 : index
    %3 = vector.load %arg1[%c1, %c0_4, %c0_5] : memref<4x2x16xbf16, #tpu.memory_space<vmem>>, vector<1x2x8xbf16>
    %4 = vector.shape_cast %3 : vector<1x2x8xbf16> to vector<2x8xbf16>
    %c2 = arith.constant 2 : index
    %c0_6 = arith.constant 0 : index
    %5 = vector.load %arg11[%c2, %c0_6] : memref<24x8xbf16, #tpu.memory_space<vmem>>, vector<2x8xbf16>
    tpu.vector_store %arg11[%c2, %c0_6], %4 {strides = array<i32>} : memref<24x8xbf16, #tpu.memory_space<vmem>>, vector<2x8xbf16>,
    %c2_7 = arith.constant 2 : index
    %c0_8 = arith.constant 0 : index
    %c0_9 = arith.constant 0 : index
    %6 = vector.load %arg1[%c2_7, %c0_8, %c0_9] : memref<4x2x16xbf16, #tpu.memory_space<vmem>>, vector<1x2x8xbf16>
    %7 = vector.shape_cast %6 : vector<1x2x8xbf16> to vector<2x8xbf16>
    %c4 = arith.constant 4 : index
    %c0_10 = arith.constant 0 : index
    %8 = vector.load %arg11[%c4, %c0_10] : memref<24x8xbf16, #tpu.memory_space<vmem>>, vector<2x8xbf16>
    tpu.vector_store %arg11[%c4, %c0_10], %7 {strides = array<i32>} : memref<24x8xbf16, #tpu.memory_space<vmem>>, vector<2x8xbf16>,
    %c3 = arith.constant 3 : index
    %c0_11 = arith.constant 0 : index
    %c0_12 = arith.constant 0 : index
    %9 = vector.load %arg1[%c3, %c0_11, %c0_12] : memref<4x2x16xbf16, #tpu.memory_space<vmem>>, vector<1x2x8xbf16>
    %10 = vector.shape_cast %9 : vector<1x2x8xbf16> to vector<2x8xbf16>
    %c6 = arith.constant 6 : index
    %c0_13 = arith.constant 0 : index
    %11 = vector.load %arg11[%c6, %c0_13] : memref<24x8xbf16, #tpu.memory_space<vmem>>, vector<2x8xbf16>
    tpu.vector_store %arg11[%c6, %c0_13], %10 {strides = array<i32>} : memref<24x8xbf16, #tpu.memory_space<vmem>>, vector<2x8xbf16>,
    %c0_14 = arith.constant 0 : index
    %c0_15 = arith.constant 0 : index
    %c4_16 = arith.constant 4 : index
    %12 = vector.load %arg1[%c0_14, %c0_15, %c4_16] : memref<4x2x16xbf16, #tpu.memory_space<vmem>>, vector<1x2x8xbf16>
    %13 = vector.shape_cast %12 : vector<1x2x8xbf16> to vector<2x8xbf16>
    %c8 = arith.constant 8 : index
    %c0_17 = arith.constant 0 : index
    %14 = vector.load %arg11[%c8, %c0_17] : memref<24x8xbf16, #tpu.memory_space<vmem>>, vector<2x8xbf16>
    tpu.vector_store %arg11[%c8, %c0_17], %13 {strides = array<i32>} : memref<24x8xbf16, #tpu.memory_space<vmem>>, vector<2x8xbf16>,
    %c1_18 = arith.constant 1 : index
    %c0_19 = arith.constant 0 : index
    %c4_20 = arith.constant 4 : index
    %15 = vector.load %arg1[%c1_18, %c0_19, %c4_20] : memref<4x2x16xbf16, #tpu.memory_space<vmem>>, vector<1x2x8xbf16>
    %16 = vector.shape_cast %15 : vector<1x2x8xbf16> to vector<2x8xbf16>
    %c10 = arith.constant 10 : index
    %c0_21 = arith.constant 0 : index
    %17 = vector.load %arg11[%c10, %c0_21] : memref<24x8xbf16, #tpu.memory_space<vmem>>, vector<2x8xbf16>
    tpu.vector_store %arg11[%c10, %c0_21], %16 {strides = array<i32>} : memref<24x8xbf16, #tpu.memory_space<vmem>>, vector<2x8xbf16>,
    %c2_22 = arith.constant 2 : index
    %c0_23 = arith.constant 0 : index
    %c4_24 = arith.constant 4 : index
    %18 = vector.load %arg1[%c2_22, %c0_23, %c4_24] : memref<4x2x16xbf16, #tpu.memory_space<vmem>>, vector<1x2x8xbf16>
    %19 = vector.shape_cast %18 : vector<1x2x8xbf16> to vector<2x8xbf16>
    %c12 = arith.constant 12 : index
    %c0_25 = arith.constant 0 : index
    %20 = vector.load %arg11[%c12, %c0_25] : memref<24x8xbf16, #tpu.memory_space<vmem>>, vector<2x8xbf16>
    tpu.vector_store %arg11[%c12, %c0_25], %19 {strides = array<i32>} : memref<24x8xbf16, #tpu.memory_space<vmem>>, vector<2x8xbf16>,
    %c3_26 = arith.constant 3 : index
    %c0_27 = arith.constant 0 : index
    %c4_28 = arith.constant 4 : index
    %21 = vector.load %arg1[%c3_26, %c0_27, %c4_28] : memref<4x2x16xbf16, #tpu.memory_space<vmem>>, vector<1x2x8xbf16>
    %22 = vector.shape_cast %21 : vector<1x2x8xbf16> to vector<2x8xbf16>
    %c14 = arith.constant 14 : index
    %c0_29 = arith.constant 0 : index
    %23 = vector.load %arg11[%c14, %c0_29] : memref<24x8xbf16, #tpu.memory_space<vmem>>, vector<2x8xbf16>
    tpu.vector_store %arg11[%c14, %c0_29], %22 {strides = array<i32>} : memref<24x8xbf16, #tpu.memory_space<vmem>>, vector<2x8xbf16>,
    %c0_30 = arith.constant 0 : index
    %c0_31 = arith.constant 0 : index
    %c8_32 = arith.constant 8 : index
    %24 = vector.load %arg1[%c0_30, %c0_31, %c8_32] : memref<4x2x16xbf16, #tpu.memory_space<vmem>>, vector<1x2x8xbf16>
    %25 = vector.shape_cast %24 : vector<1x2x8xbf16> to vector<2x8xbf16>
    %c16 = arith.constant 16 : index
    %c0_33 = arith.constant 0 : index
    %26 = vector.load %arg11[%c16, %c0_33] : memref<24x8xbf16, #tpu.memory_space<vmem>>, vector<2x8xbf16>
    tpu.vector_store %arg11[%c16, %c0_33], %25 {strides = array<i32>} : memref<24x8xbf16, #tpu.memory_space<vmem>>, vector<2x8xbf16>,
    %c1_34 = arith.constant 1 : index
    %c0_35 = arith.constant 0 : index
    %c8_36 = arith.constant 8 : index
    %27 = vector.load %arg1[%c1_34, %c0_35, %c8_36] : memref<4x2x16xbf16, #tpu.memory_space<vmem>>, vector<1x2x8xbf16>
    %28 = vector.shape_cast %27 : vector<1x2x8xbf16> to vector<2x8xbf16>
    %c18 = arith.constant 18 : index
    %c0_37 = arith.constant 0 : index
    %29 = vector.load %arg11[%c18, %c0_37] : memref<24x8xbf16, #tpu.memory_space<vmem>>, vector<2x8xbf16>
    tpu.vector_store %arg11[%c18, %c0_37], %28 {strides = array<i32>} : memref<24x8xbf16, #tpu.memory_space<vmem>>, vector<2x8xbf16>,
    %c2_38 = arith.constant 2 : index
    %c0_39 = arith.constant 0 : index
    %c8_40 = arith.constant 8 : index
    %30 = vector.load %arg1[%c2_38, %c0_39, %c8_40] : memref<4x2x16xbf16, #tpu.memory_space<vmem>>, vector<1x2x8xbf16>
    %31 = vector.shape_cast %30 : vector<1x2x8xbf16> to vector<2x8xbf16>
    %c20 = arith.constant 20 : index
    %c0_41 = arith.constant 0 : index
    %32 = vector.load %arg11[%c20, %c0_41] : memref<24x8xbf16, #tpu.memory_space<vmem>>, vector<2x8xbf16>
    tpu.vector_store %arg11[%c20, %c0_41], %31 {strides = array<i32>} : memref<24x8xbf16, #tpu.memory_space<vmem>>, vector<2x8xbf16>,
    %c3_42 = arith.constant 3 : index
    %c0_43 = arith.constant 0 : index
    %c8_44 = arith.constant 8 : index
    %33 = vector.load %arg1[%c3_42, %c0_43, %c8_44] : memref<4x2x16xbf16, #tpu.memory_space<vmem>>, vector<1x2x8xbf16>
    %34 = vector.shape_cast %33 : vector<1x2x8xbf16> to vector<2x8xbf16>
    %c22 = arith.constant 22 : index
    %c0_45 = arith.constant 0 : index
    %35 = vector.load %arg11[%c22, %c0_45] : memref<24x8xbf16, #tpu.memory_space<vmem>>, vector<2x8xbf16>
    tpu.vector_store %arg11[%c22, %c0_45], %34 {strides = array<i32>} : memref<24x8xbf16, #tpu.memory_space<vmem>>, vector<2x8xbf16>,
    %c0_46 = arith.constant 0 : index
    %c0_47 = arith.constant 0 : index
    %36 = vector.load %arg11[%c0_46, %c0_47] : memref<24x8xbf16, #tpu.memory_space<vmem>>, vector<24x8xbf16>
    %c0_48 = arith.constant 0 : index
    %c0_49 = arith.constant 0 : index
    %37 = vector.load %arg2[%c0_48, %c0_49] : memref<8x32xbf16, #tpu.memory_space<vmem>>, vector<8x32xbf16>
    %cst = arith.constant dense<0.000000e+00> : vector<24x32xf32>
    %38 = tpu.matmul %36, %37, %cst {dimension_numbers = #tpu.dot_dimension_numbers<[1], [0], [0], [1], [0, 0, 1, 1], [], []>} : vector<24x8xbf16>, vector<8x32xbf16>, vector<24x32xf32> -> vector<24x32xf32>
    %c0_50 = arith.constant 0 : index
    %c0_51 = arith.constant 0 : index
    %39 = vector.load %arg3[%c0_50, %c0_51] : memref<1x32xf32, #tpu.memory_space<vmem>>, vector<1x32xf32>
    %40 = vector.broadcast %39 : vector<1x32xf32> to vector<24x32xf32>
    %41 = arith.addf %38, %40 : vector<24x32xf32>
    %cst_52 = arith.constant 0.000000e+00 : f32
    %42 = vector.broadcast %cst_52 : f32 to vector<24x32xf32>
    %43 = arith.maximumf %41, %42 : vector<24x32xf32>
    %44 = arith.truncf %43 : vector<24x32xf32> to vector<24x32xbf16>
    %c0_53 = arith.constant 0 : index
    %c0_54 = arith.constant 0 : index
    %45 = vector.load %arg4[%c0_53, %c0_54] : memref<32x32xbf16, #tpu.memory_space<vmem>>, vector<32x32xbf16>
    %cst_55 = arith.constant dense<0.000000e+00> : vector<24x32xf32>
    %46 = tpu.matmul %44, %45, %cst_55 {dimension_numbers = #tpu.dot_dimension_numbers<[1], [0], [0], [1], [0, 0, 1, 1], [], []>} : vector<24x32xbf16>, vector<32x32xbf16>, vector<24x32xf32> -> vector<24x32xf32>
    %c0_56 = arith.constant 0 : index
    %c0_57 = arith.constant 0 : index
    %47 = vector.load %arg5[%c0_56, %c0_57] : memref<1x32xf32, #tpu.memory_space<vmem>>, vector<1x32xf32>
    %48 = vector.broadcast %47 : vector<1x32xf32> to vector<24x32xf32>
    %49 = arith.addf %46, %48 : vector<24x32xf32>
    %cst_58 = arith.constant 0.000000e+00 : f32
    %50 = vector.broadcast %cst_58 : f32 to vector<24x32xf32>
    %51 = arith.maximumf %49, %50 : vector<24x32xf32>
    %52 = arith.truncf %51 : vector<24x32xf32> to vector<24x32xbf16>
    %c0_59 = arith.constant 0 : index
    %c0_60 = arith.constant 0 : index
    %53 = vector.load %arg6[%c0_59, %c0_60] : memref<32x32xbf16, #tpu.memory_space<vmem>>, vector<32x32xbf16>
    %cst_61 = arith.constant dense<0.000000e+00> : vector<24x32xf32>
    %54 = tpu.matmul %52, %53, %cst_61 {dimension_numbers = #tpu.dot_dimension_numbers<[1], [0], [0], [1], [0, 0, 1, 1], [], []>} : vector<24x32xbf16>, vector<32x32xbf16>, vector<24x32xf32> -> vector<24x32xf32>
    %c0_62 = arith.constant 0 : index
    %c0_63 = arith.constant 0 : index
    %55 = vector.load %arg7[%c0_62, %c0_63] : memref<1x32xf32, #tpu.memory_space<vmem>>, vector<1x32xf32>
    %56 = vector.broadcast %55 : vector<1x32xf32> to vector<24x32xf32>
    %57 = arith.addf %54, %56 : vector<24x32xf32>
    %cst_64 = arith.constant 0.000000e+00 : f32
    %58 = vector.broadcast %cst_64 : f32 to vector<24x32xf32>
    %59 = arith.maximumf %57, %58 : vector<24x32xf32>
    %60 = vector.extract_strided_slice %59 {offsets = [0, 0], sizes = [2, 32], strides = [1, 1]} : vector<24x32xf32> to vector<2x32xf32>
    %61 = vector.extract_strided_slice %59 {offsets = [2, 0], sizes = [2, 32], strides = [1, 1]} : vector<24x32xf32> to vector<2x32xf32>
    %62 = arith.addf %60, %61 : vector<2x32xf32>
    %63 = vector.extract_strided_slice %59 {offsets = [4, 0], sizes = [2, 32], strides = [1, 1]} : vector<24x32xf32> to vector<2x32xf32>
    %64 = arith.addf %62, %63 : vector<2x32xf32>
    %65 = vector.extract_strided_slice %59 {offsets = [6, 0], sizes = [2, 32], strides = [1, 1]} : vector<24x32xf32> to vector<2x32xf32>
    %66 = arith.addf %64, %65 : vector<2x32xf32>
    %67 = vector.extract_strided_slice %59 {offsets = [8, 0], sizes = [2, 32], strides = [1, 1]} : vector<24x32xf32> to vector<2x32xf32>
    %68 = arith.addf %66, %67 : vector<2x32xf32>
    %69 = vector.extract_strided_slice %59 {offsets = [10, 0], sizes = [2, 32], strides = [1, 1]} : vector<24x32xf32> to vector<2x32xf32>
    %70 = arith.addf %68, %69 : vector<2x32xf32>
    %71 = vector.extract_strided_slice %59 {offsets = [12, 0], sizes = [2, 32], strides = [1, 1]} : vector<24x32xf32> to vector<2x32xf32>
    %72 = arith.addf %70, %71 : vector<2x32xf32>
    %73 = vector.extract_strided_slice %59 {offsets = [14, 0], sizes = [2, 32], strides = [1, 1]} : vector<24x32xf32> to vector<2x32xf32>
    %74 = arith.addf %72, %73 : vector<2x32xf32>
    %75 = vector.extract_strided_slice %59 {offsets = [16, 0], sizes = [2, 32], strides = [1, 1]} : vector<24x32xf32> to vector<2x32xf32>
    %76 = arith.addf %74, %75 : vector<2x32xf32>
    %77 = vector.extract_strided_slice %59 {offsets = [18, 0], sizes = [2, 32], strides = [1, 1]} : vector<24x32xf32> to vector<2x32xf32>
    %78 = arith.addf %76, %77 : vector<2x32xf32>
    %79 = vector.extract_strided_slice %59 {offsets = [20, 0], sizes = [2, 32], strides = [1, 1]} : vector<24x32xf32> to vector<2x32xf32>
    %80 = arith.addf %78, %79 : vector<2x32xf32>
    %81 = vector.extract_strided_slice %59 {offsets = [22, 0], sizes = [2, 32], strides = [1, 1]} : vector<24x32xf32> to vector<2x32xf32>
    %82 = arith.addf %80, %81 : vector<2x32xf32>
    %cst_65 = arith.constant 0.0833333358 : f32
    %83 = vector.broadcast %cst_65 : f32 to vector<2x32xf32>
    %84 = arith.mulf %82, %83 : vector<2x32xf32>
    %85 = arith.truncf %84 : vector<2x32xf32> to vector<2x32xbf16>
    %c0_66 = arith.constant 0 : index
    %c0_67 = arith.constant 0 : index
    %86 = vector.load %arg8[%c0_66, %c0_67] : memref<32x8xbf16, #tpu.memory_space<vmem>>, vector<32x8xbf16>
    %cst_68 = arith.constant dense<0.000000e+00> : vector<2x8xf32>
    %87 = tpu.matmul %85, %86, %cst_68 {dimension_numbers = #tpu.dot_dimension_numbers<[1], [0], [0], [1], [0, 0, 1, 1], [], []>} : vector<2x32xbf16>, vector<32x8xbf16>, vector<2x8xf32> -> vector<2x8xf32>
    %c0_69 = arith.constant 0 : index
    %c0_70 = arith.constant 0 : index
    %88 = vector.load %arg9[%c0_69, %c0_70] : memref<1x8xf32, #tpu.memory_space<vmem>>, vector<1x8xf32>
    %89 = vector.broadcast %88 : vector<1x8xf32> to vector<2x8xf32>
    %90 = arith.addf %87, %89 : vector<2x8xf32>
    %c0_71 = arith.constant 0 : index
    %c0_72 = arith.constant 0 : index
    %91 = vector.load %arg10[%c0_71, %c0_72] : memref<2x8xf32, #tpu.memory_space<vmem>>, vector<2x8xf32>
    tpu.vector_store %arg10[%c0_71, %c0_72], %90 {strides = array<i32>} : memref<2x8xf32, #tpu.memory_space<vmem>>, vector<2x8xf32>,
    return
  }
  func.func @transform_0(%arg0: i32) -> (i32, i32, i32) {
    %c0_i32 = arith.constant 0 : i32
    %c0_i32_0 = arith.constant 0 : i32
    %c0_i32_1 = arith.constant 0 : i32
    return %c0_i32, %arg0, %c0_i32_0 : i32, i32, i32
  }
  func.func @transform_1(%arg0: i32) -> (i32, i32) {
    %c0_i32 = arith.constant 0 : i32
    %c0_i32_0 = arith.constant 0 : i32
    %c0_i32_1 = arith.constant 0 : i32
    return %c0_i32, %c0_i32_0 : i32, i32
  }
  func.func @transform_2(%arg0: i32) -> (i32, i32) {
    %c0_i32 = arith.constant 0 : i32
    %c0_i32_0 = arith.constant 0 : i32
    %c0_i32_1 = arith.constant 0 : i32
    return %c0_i32, %c0_i32_0 : i32, i32
  }
  func.func @transform_3(%arg0: i32) -> (i32, i32) {
    %c0_i32 = arith.constant 0 : i32
    %c0_i32_0 = arith.constant 0 : i32
    %c0_i32_1 = arith.constant 0 : i32
    return %c0_i32, %c0_i32_0 : i32, i32
  }
  func.func @transform_4(%arg0: i32) -> (i32, i32) {
    %c0_i32 = arith.constant 0 : i32
    %c0_i32_0 = arith.constant 0 : i32
    %c0_i32_1 = arith.constant 0 : i32
    return %c0_i32, %c0_i32_0 : i32, i32
  }
  func.func @transform_5(%arg0: i32) -> (i32, i32) {
    %c0_i32 = arith.constant 0 : i32
    %c0_i32_0 = arith.constant 0 : i32
    %c0_i32_1 = arith.constant 0 : i32
    return %c0_i32, %c0_i32_0 : i32, i32
  }
  func.func @transform_6(%arg0: i32) -> (i32, i32) {
    %c0_i32 = arith.constant 0 : i32
    %c0_i32_0 = arith.constant 0 : i32
    %c0_i32_1 = arith.constant 0 : i32
    return %c0_i32, %c0_i32_0 : i32, i32
  }
  func.func @transform_7(%arg0: i32) -> (i32, i32) {
    %c0_i32 = arith.constant 0 : i32
    %c0_i32_0 = arith.constant 0 : i32
    %c0_i32_1 = arith.constant 0 : i32
    return %c0_i32, %c0_i32_0 : i32, i32
  }
  func.func @transform_8(%arg0: i32) -> (i32, i32) {
    %c0_i32 = arith.constant 0 : i32
    %c0_i32_0 = arith.constant 0 : i32
    %c0_i32_1 = arith.constant 0 : i32
    return %c0_i32, %c0_i32_0 : i32, i32
  }
  func.func @transform_9(%arg0: i32) -> (i32, i32) {
    %c0_i32 = arith.constant 0 : i32
    %c0_i32_0 = arith.constant 0 : i32
    return %arg0, %c0_i32 : i32, i32
  }
}

</mosaic_0001>

<llo_original>
// kernel: tpu_custom_call.1
$region0: #{tpu_custom_call.1}
  #allocation0 [shape = 'u32[]', space=smem, size = 0x4, offset = 0x4, fixed_abs, tag = 'smem constant byte address 0x4 - core index']
  #allocation1 [shape = 'u32[144,128]{1,0:T(1,128)}', space=vmem, size = 0x12000, scoped, tag = 'internal scratch']
  #allocation2 [shape = 'bf16[24,8]{1,0:T(8,128)(2,1)}', space=vmem, size = 0x1800, scoped, tag = 'scratch operand']
  %s0 = inlined_call_operand.hbm [shape: bf16[4,2,16], index: 0, kind: input, shape index: {}]
  %s1 = inlined_call_operand.hbm [shape: bf16[8,32], index: 1, kind: input, shape index: {}]
  %s2 = inlined_call_operand.vmem [shape: f32[1,32], index: 2, kind: input, shape index: {}]
  %s3 = inlined_call_operand.vmem [shape: bf16[32,32], index: 3, kind: input, shape index: {}]
  %s4 = inlined_call_operand.vmem [shape: f32[1,32], index: 4, kind: input, shape index: {}]
  %s5 = inlined_call_operand.vmem [shape: bf16[32,32], index: 5, kind: input, shape index: {}]
  %s6 = inlined_call_operand.vmem [shape: f32[1,32], index: 6, kind: input, shape index: {}]
  %s7 = inlined_call_operand.vmem [shape: bf16[32,8], index: 7, kind: input, shape index: {}]
  %s8 = inlined_call_operand.vmem [shape: f32[1,8], index: 8, kind: input, shape index: {}]
  %s9 = inlined_call_operand.hbm [shape: f32[2,8], index: 9, kind: output, shape index: {}]
  %s10 = sld [smem:[#allocation0]]
  $region54: #{tpu_custom_call.1} parent=0
    _
  %s12 = ssub.s32 1, %s10
  %s13 = scalar_select 0, %s12, %s10
  $region1: #{tpu_custom_call.1} parent=0
    #allocation3 [shape = 'u8[2048]{0}', space=vmem, size = 0x800, scoped, tag = 'input window, operand 0, single buffered']
    #allocation4 [shape = 's32[1]{0}', space=sflag, size = 0x4, scoped, tag = 'scoped memory for tpu_custom_call.1']
    #allocation5 [shape = 's32[1]{0}', space=sflag, size = 0x4, scoped, tag = 'scoped memory for tpu_custom_call.1']
    #allocation6 [shape = 'u8[2048]{0}', space=vmem, size = 0x800, scoped, tag = 'input window, operand 1, single buffered']
    #allocation7 [shape = 's32[1]{0}', space=sflag, size = 0x4, scoped, tag = 'scoped memory for tpu_custom_call.1']
    #allocation8 [shape = 'u8[1024]{0}', space=vmem, size = 0x400, scoped, tag = 'output window, operand 0, single buffered']
    %14 = vsyncpa [#allocation4], 0
    %15 = vsyncpa [#allocation7], 0
    %16 = vsyncpa [#allocation5], 0
    // Predicated region
    $region2: #{tpu_custom_call.1} parent=1 // pred_check
      _
    $region3: #{tpu_custom_call.1} parent=1 // pred_check_branch
      %18 = sbr.rel (0) target = $region5
    $region4: #{tpu_custom_call.1} parent=1 // pred_region
      %s20 = ssub.s32 64, 64
      %21 = vsyncadd [#allocation4], %s20
      %s22 = sshll.u32 [#allocation3], 4
      %s23 = int_to_ptr.vmem [resolvable:$true] %s22
      %28 = dma.hbm_to_vmem [thread:$0]  %s0, 64, %s23, [#allocation4], 16, 16, 1
    $region5: #{tpu_custom_call.1} parent=1 // pred_fallthru
      _
    // Predicated region
    $region6: #{tpu_custom_call.1} parent=1 // pred_check
      _
    $region7: #{tpu_custom_call.1} parent=1 // pred_check_branch
      %30 = sbr.rel (0) target = $region9
    $region8: #{tpu_custom_call.1} parent=1 // pred_region
      %s32 = ssub.s32 64, 64
      %33 = vsyncadd [#allocation7], %s32
      %s35 = sshll.u32 [#allocation6], 4
      %s36 = int_to_ptr.vmem [resolvable:$true] %s35
      %38 = dma.hbm_to_vmem [thread:$0]  %s1, 64, %s36, [#allocation7]
    $region9: #{tpu_custom_call.1} parent=1 // pred_fallthru
      _
    // Predicated region
    $region10: #{tpu_custom_call.1} parent=1 // pred_check
      _
    $region11: #{tpu_custom_call.1} parent=1 // pred_check_branch
      %40 = sbr.rel (0) target = $region13
    $region12: #{tpu_custom_call.1} parent=1 // pred_region
      _
    $region13: #{tpu_custom_call.1} parent=1 // pred_fallthru
      _
    // Predicated region
    $region14: #{tpu_custom_call.1} parent=1 // pred_check
      _
    $region15: #{tpu_custom_call.1} parent=1 // pred_check_branch
      %42 = sbr.rel (0) target = $region17
    $region16: #{tpu_custom_call.1} parent=1 // pred_region
      _
    $region17: #{tpu_custom_call.1} parent=1 // pred_fallthru
      _
    // Predicated region
    $region18: #{tpu_custom_call.1} parent=1 // pred_check
      _
    $region19: #{tpu_custom_call.1} parent=1 // pred_check_branch
      %44 = sbr.rel (0) target = $region21
    $region20: #{tpu_custom_call.1} parent=1 // pred_region
      _
    $region21: #{tpu_custom_call.1} parent=1 // pred_fallthru
      _
    // Predicated region
    $region22: #{tpu_custom_call.1} parent=1 // pred_check
      _
    $region23: #{tpu_custom_call.1} parent=1 // pred_check_branch
      %46 = sbr.rel (0) target = $region25
    $region24: #{tpu_custom_call.1} parent=1 // pred_region
      _
    $region25: #{tpu_custom_call.1} parent=1 // pred_fallthru
      _
    // Predicated region
    $region26: #{tpu_custom_call.1} parent=1 // pred_check
      _
    $region27: #{tpu_custom_call.1} parent=1 // pred_check_branch
      %48 = sbr.rel (0) target = $region29
    $region28: #{tpu_custom_call.1} parent=1 // pred_region
      _
    $region29: #{tpu_custom_call.1} parent=1 // pred_fallthru
      _
    // Predicated region
    $region30: #{tpu_custom_call.1} parent=1 // pred_check
      _
    $region31: #{tpu_custom_call.1} parent=1 // pred_check_branch
      %50 = sbr.rel (0) target = $region33
    $region32: #{tpu_custom_call.1} parent=1 // pred_region
      _
    $region33: #{tpu_custom_call.1} parent=1 // pred_fallthru
      _
    // Predicated region
    $region34: #{tpu_custom_call.1} parent=1 // pred_check
      _
    $region35: #{tpu_custom_call.1} parent=1 // pred_check_branch
      %52 = sbr.rel (0) target = $region37
    $region36: #{tpu_custom_call.1} parent=1 // pred_region
      _
    $region37: #{tpu_custom_call.1} parent=1 // pred_fallthru
      _
    // Predicated region
    $region38: #{tpu_custom_call.1} parent=1 // pred_check
      _
    $region39: #{tpu_custom_call.1} parent=1 // pred_check_branch
      %54 = sbr.rel (0) target = $region41
    $region40: #{tpu_custom_call.1} parent=1 // pred_region
      %55 = dma.done [#allocation4], 64
    $region41: #{tpu_custom_call.1} parent=1 // pred_fallthru
      _
    // Predicated region
    $region42: #{tpu_custom_call.1} parent=1 // pred_check
      _
    $region43: #{tpu_custom_call.1} parent=1 // pred_check_branch
      %57 = sbr.rel (0) target = $region45
    $region44: #{tpu_custom_call.1} parent=1 // pred_region
      %58 = dma.done [#allocation7], 64
    $region45: #{tpu_custom_call.1} parent=1 // pred_fallthru
      _
    %v60 = vld [vmem:[#allocation3] sm:$0x1]
    %vm61 = vcmask 57344
    %62 = vst.msk [vmem:[#allocation2] sm:$0x1] %vm61, %v60
    %s63 = scalar_lea.vmem [#allocation3], 1
    %v64 = vld [vmem:[%s63] sm:$0x1]
    %v67 = vunpack.c.l.s4 1935823168
    %v68 = vunpack.c.0.s8 %v67
    %v69 = vlaneseq
    %v70 = vshrl.u32 %v69, 7
    %v71 = vsub.s32 %v68, %v70
    %v72 = vrot.slane %v64, %v71
    %v73 = vcombine.low %v72, %v72
    %v75 = vunpack.c.l.s4 1935823168
    %v76 = vunpack.c.0.s8 %v75
    %v77 = vlaneseq
    %v78 = vshrl.u32 %v77, 7
    %v79 = vsub.s32 %v76, %v78
    %v80 = vrot.slane %v73, %v79
    %vm82 = vcmask 58369
    %83 = vst.msk [vmem:[#allocation2] sm:$0x2] %vm82, %v80
    %s84 = scalar_lea.vmem [#allocation3], 2
    %v85 = vld [vmem:[%s84] sm:$0x1]
    %v87 = vcombine.low %v85, %v85
    %v89 = vunpack.c.l.s4 1935823168
    %v90 = vunpack.c.0.s8 %v89
    %v91 = vlaneseq
    %v92 = vshrl.u32 %v91, 7
    %v93 = vsub.s32 %v90, %v92
    %v94 = vrot.slane %v87, %v93
    %v96 = vunpack.c.l.s4 1935823168
    %v97 = vunpack.c.0.s8 %v96
    %v98 = vlaneseq
    %v99 = vshrl.u32 %v98, 7
    %v100 = vsub.s32 %v97, %v99
    %v101 = vrot.slane %v94, %v100
    %vm103 = vcmask 59394
    %104 = vst.msk [vmem:[#allocation2] sm:$0x4] %vm103, %v101
    %s105 = scalar_lea.vmem [#allocation3], 3
    %v106 = vld [vmem:[%s105] sm:$0x1]
    %v108 = vcombine.low %v106, %v106
    %v110 = vunpack.c.l.s4 1935823168
    %v111 = vunpack.c.0.s8 %v110
    %v112 = vlaneseq
    %v113 = vshrl.u32 %v112, 7
    %v114 = vsub.s32 %v111, %v113
    %v115 = vrot.slane %v108, %v114
    %v116 = vcombine.low %v115, %v115
    %v118 = vunpack.c.l.s4 1935823168
    %v119 = vunpack.c.0.s8 %v118
    %v120 = vlaneseq
    %v121 = vshrl.u32 %v120, 7
    %v122 = vsub.s32 %v119, %v121
    %v123 = vrot.slane %v116, %v122
    %vm125 = vcmask 60419
    %126 = vst.msk [vmem:[#allocation2] sm:$0x8] %vm125, %v123
    %v127 = vld [vmem:[#allocation3] sm:$0x1]
    %v130 = vunpack.c.l.s4 1935823168
    %v131 = vunpack.c.0.s8 %v130
    %v132 = vlaneseq
    %v133 = vshrl.u32 %v132, 7
    %v134 = vsub.s32 %v131, %v133
    %v135 = vrot.slane %v127, %v134
    %v137 = vunpack.c.l.s4 1935823168
    %v138 = vunpack.c.0.s8 %v137
    %v139 = vlaneseq
    %v140 = vshrl.u32 %v139, 7
    %v141 = vsub.s32 %v138, %v140
    %v142 = vrot.slane %v135, %v141
    %143 = vrot.lane.b32.xlu0 %v142, 124
    %v144 = vpop.permute.xlu0 %143
    %146 = vst.msk [vmem:[#allocation2 + $0x4] sm:$0x1] %vm61, %v144
    %v147 = vld [vmem:[%s63] sm:$0x1]
    %v150 = vunpack.c.l.s4 1935823168
    %v151 = vunpack.c.0.s8 %v150
    %v152 = vlaneseq
    %v153 = vshrl.u32 %v152, 7
    %v154 = vsub.s32 %v151, %v153
    %v155 = vrot.slane %v147, %v154
    %v156 = vcombine.low %v155, %v155
    %v158 = vunpack.c.l.s4 1935823168
    %v159 = vunpack.c.0.s8 %v158
    %v160 = vlaneseq
    %v161 = vshrl.u32 %v160, 7
    %v162 = vsub.s32 %v159, %v161
    %v163 = vrot.slane %v156, %v162
    %164 = vrot.lane.b32.xlu0 %v163, 124
    %v165 = vpop.permute.xlu0 %164
    %167 = vst.msk [vmem:[#allocation2 + $0x4] sm:$0x2] %vm82, %v165
    %v168 = vld [vmem:[%s84] sm:$0x1]
    %v170 = vcombine.low %v168, %v168
    %v172 = vunpack.c.l.s4 1935823168
    %v173 = vunpack.c.0.s8 %v172
    %v174 = vlaneseq
    %v175 = vshrl.u32 %v174, 7
    %v176 = vsub.s32 %v173, %v175
    %v177 = vrot.slane %v170, %v176
    %v179 = vunpack.c.l.s4 1935823168
    %v180 = vunpack.c.0.s8 %v179
    %v181 = vlaneseq
    %v182 = vshrl.u32 %v181, 7
    %v183 = vsub.s32 %v180, %v182
    %v184 = vrot.slane %v177, %v183
    %185 = vrot.lane.b32.xlu0 %v184, 124
    %v186 = vpop.permute.xlu0 %185
    %188 = vst.msk [vmem:[#allocation2 + $0x4] sm:$0x4] %vm103, %v186
    %v189 = vld [vmem:[%s105] sm:$0x1]
    %v191 = vcombine.low %v189, %v189
    %v193 = vunpack.c.l.s4 1935823168
    %v194 = vunpack.c.0.s8 %v193
    %v195 = vlaneseq
    %v196 = vshrl.u32 %v195, 7
    %v197 = vsub.s32 %v194, %v196
    %v198 = vrot.slane %v191, %v197
    %v199 = vcombine.low %v198, %v198
    %v201 = vunpack.c.l.s4 1935823168
    %v202 = vunpack.c.0.s8 %v201
    %v203 = vlaneseq
    %v204 = vshrl.u32 %v203, 7
    %v205 = vsub.s32 %v202, %v204
    %v206 = vrot.slane %v199, %v205
    %207 = vrot.lane.b32.xlu0 %v206, 124
    %v208 = vpop.permute.xlu0 %207
    %210 = vst.msk [vmem:[#allocation2 + $0x4] sm:$0x8] %vm125, %v208
    %v211 = vld [vmem:[#allocation3] sm:$0x1]
    %v214 = vunpack.c.l.s4 1935823168
    %v215 = vunpack.c.0.s8 %v214
    %v216 = vlaneseq
    %v217 = vshrl.u32 %v216, 7
    %v218 = vsub.s32 %v215, %v217
    %v219 = vrot.slane %v211, %v218
    %v221 = vunpack.c.l.s4 1935823168
    %v222 = vunpack.c.0.s8 %v221
    %v223 = vlaneseq
    %v224 = vshrl.u32 %v223, 7
    %v225 = vsub.s32 %v222, %v224
    %v226 = vrot.slane %v219, %v225
    %227 = vrot.lane.b32.xlu0 %v226, 120
    %v228 = vpop.permute.xlu0 %227
    %230 = vst.msk [vmem:[#allocation2 + $0x8] sm:$0x1] %vm61, %v228
    %v231 = vld [vmem:[%s63] sm:$0x1]
    %v234 = vunpack.c.l.s4 1935823168
    %v235 = vunpack.c.0.s8 %v234
    %v236 = vlaneseq
    %v237 = vshrl.u32 %v236, 7
    %v238 = vsub.s32 %v235, %v237
    %v239 = vrot.slane %v231, %v238
    %v240 = vcombine.low %v239, %v239
    %v242 = vunpack.c.l.s4 1935823168
    %v243 = vunpack.c.0.s8 %v242
    %v244 = vlaneseq
    %v245 = vshrl.u32 %v244, 7
    %v246 = vsub.s32 %v243, %v245
    %v247 = vrot.slane %v240, %v246
    %248 = vrot.lane.b32.xlu0 %v247, 120
    %v249 = vpop.permute.xlu0 %248
    %251 = vst.msk [vmem:[#allocation2 + $0x8] sm:$0x2] %vm82, %v249
    %v252 = vld [vmem:[%s84] sm:$0x1]
    %v254 = vcombine.low %v252, %v252
    %v256 = vunpack.c.l.s4 1935823168
    %v257 = vunpack.c.0.s8 %v256
    %v258 = vlaneseq
    %v259 = vshrl.u32 %v258, 7
    %v260 = vsub.s32 %v257, %v259
    %v261 = vrot.slane %v254, %v260
    %v263 = vunpack.c.l.s4 1935823168
    %v264 = vunpack.c.0.s8 %v263
    %v265 = vlaneseq
    %v266 = vshrl.u32 %v265, 7
    %v267 = vsub.s32 %v264, %v266
    %v268 = vrot.slane %v261, %v267
    %269 = vrot.lane.b32.xlu0 %v268, 120
    %v270 = vpop.permute.xlu0 %269
    %272 = vst.msk [vmem:[#allocation2 + $0x8] sm:$0x4] %vm103, %v270
    %v273 = vld [vmem:[%s105] sm:$0x1]
    %v275 = vcombine.low %v273, %v273
    %v277 = vunpack.c.l.s4 1935823168
    %v278 = vunpack.c.0.s8 %v277
    %v279 = vlaneseq
    %v280 = vshrl.u32 %v279, 7
    %v281 = vsub.s32 %v278, %v280
    %v282 = vrot.slane %v275, %v281
    %v283 = vcombine.low %v282, %v282
    %v285 = vunpack.c.l.s4 1935823168
    %v286 = vunpack.c.0.s8 %v285
    %v287 = vlaneseq
    %v288 = vshrl.u32 %v287, 7
    %v289 = vsub.s32 %v286, %v288
    %v290 = vrot.slane %v283, %v289
    %291 = vrot.lane.b32.xlu0 %v290, 120
    %v292 = vpop.permute.xlu0 %291
    %294 = vst.msk [vmem:[#allocation2 + $0x8] sm:$0x8] %vm125, %v292
    %v295 = vld [vmem:[#allocation2] sm:$0xf]
    %v296 = vld [vmem:[#allocation2 + $0x4] sm:$0xf]
    %v297 = vld [vmem:[#allocation2 + $0x8] sm:$0xf]
    %v298 = vld [vmem:[#allocation6] sm:$0xf]
    %v299 = vld [vmem:[%s2] sm:$0x1]
    %v301 = vlaneseq
    %v302 = vshrl.u32 %v301, 7
    %v303 = vsub.s32 0, %v302
    %v304 = vrot.slane %v299, %v303
    %v309 = vunpack.c.l.b16 %v295
    %v310 = vunpack.c.l.b16 %v296
    %v311 = vunpack.c.l.b16 %v297
    %v312 = vpack.c.b16 %v310, %v309
    %v313 = vpack.c.b16 %v311, %v311
    %vm314 = vcmask 64512
    %v316 = vsel %vm314, %v312, 0
    %v319 = vsel %vm314, %v313, 0
    %vm321 = vcmask 1043456
    %v323 = vsel %vm321, %v298, 0
    %325 = vmatprep.subr.bf16.mxu0 0
    %326 = vmatpush1.bf16.msra.mxu0 %v323
    %327 = vmatprep.subr.bf16.mxu0 0
    %328 = vmatpush1.bf16.msra.mxu0 0
    %329 = vmatprep.subr.bf16.mxu0 0
    %330 = vmatpush1.bf16.msra.mxu0 0
    %331 = vmatprep.subr.bf16.mxu0 0
    %332 = vmatpush1.bf16.msra.mxu0 0
    %333 = vmatprep.subr.bf16.mxu0 0
    %334 = vmatpush1.bf16.msra.mxu0 0
    %335 = vmatprep.subr.bf16.mxu0 0
    %336 = vmatpush1.bf16.msra.mxu0 0
    %337 = vmatprep.subr.bf16.mxu0 0
    %338 = vmatpush1.bf16.msra.mxu0 0
    %339 = vmatprep.subr.bf16.mxu0 0
    %340 = vmatpush1.bf16.msra.mxu0 0
    %341 = vmatprep.subr.bf16.mxu0 0
    %342 = vmatpush1.bf16.msra.mxu0 0
    %343 = vmatprep.subr.bf16.mxu0 0
    %344 = vmatpush1.bf16.msra.mxu0 0
    %345 = vmatprep.subr.bf16.mxu0 0
    %346 = vmatpush1.bf16.msra.mxu0 0
    %347 = vmatprep.subr.bf16.mxu0 0
    %348 = vmatpush1.bf16.msra.mxu0 0
    %349 = vmatprep.subr.bf16.mxu0 0
    %350 = vmatpush1.bf16.msra.mxu0 0
    %351 = vmatprep.subr.bf16.mxu0 0
    %352 = vmatpush1.bf16.msra.mxu0 0
    %353 = vmatprep.subr.bf16.mxu0 0
    %354 = vmatpush1.bf16.msra.mxu0 0
    %355 = vmatprep.subr.bf16.mxu0 0
    %356 = vmatpush1.bf16.msra.mxu0 0
    %357 = vmatprep.mubr.bf16.mxu0 0
    %358 = vmatmul.mubr.bf16.gmra.mrb[0].mxu0 %v316
    %v359 = vpop.f32.mrb[0].mxu0
    %v360 = vadd.f32 %v304, %v359
    %v361 = vpop.f32.mrb[0].mxu0
    %v362 = vpop.f32.mrb[0].mxu0
    %v363 = vadd.f32 %v304, %v362
    %v364 = vpop.f32.mrb[0].mxu0
    %365 = vmatprep.mubr.bf16.mxu0 0
    %366 = vmatmul.mubr.bf16.gmra.mrb[0].mxu0 %v319
    %v367 = vpop.f32.mrb[0].mxu0
    %v368 = vadd.f32 %v304, %v367
    %v369 = vpop.f32.mrb[0].mxu0
    %v370 = vpop.f32.mrb[0].mxu0
    %v371 = vpop.f32.mrb[0].mxu0
    %372 = vdwg.mxu0
    %v373 = vmax.f32 %v360, 0.0
    %v374 = vmax.f32 %v363, 0.0
    %v375 = vmax.f32 %v368, 0.0
    %v376 = vpack.c.bf16 %v374, %v373
    %v377 = vpack.c.bf16 %v375, %v375
    %v378 = vld [vmem:[%s3] sm:$0xf]
    %v379 = vld [vmem:[%s3 + $0x4] sm:$0xf]
    %v380 = vld [vmem:[%s3 + $0x8] sm:$0xf]
    %v381 = vld [vmem:[%s3 + $0xc] sm:$0xf]
    %v382 = vld [vmem:[%s4] sm:$0x1]
    %v384 = vlaneseq
    %v385 = vshrl.u32 %v384, 7
    %v386 = vsub.s32 0, %v385
    %v387 = vrot.slane %v382, %v386
    %v393 = vunpack.c.l.b16 %v378
    %v394 = vunpack.c.l.b16 %v379
    %v395 = vunpack.c.l.b16 %v380
    %v396 = vunpack.c.l.b16 %v381
    %v397 = vpack.c.b16 %v394, %v393
    %v398 = vpack.c.b16 %v396, %v395
    %vm401 = vcmask 261120
    %v403 = vsel %vm401, %v376, 0
    %v406 = vsel %vm401, %v377, 0
    %408 = vmatprep.subr.bf16.mxu0 0
    %409 = vmatpush1.bf16.msra.mxu0 %v397
    %410 = vmatprep.subr.bf16.mxu0 0
    %411 = vmatpush1.bf16.msra.mxu0 %v398
    %412 = vmatprep.subr.bf16.mxu0 0
    %413 = vmatpush1.bf16.msra.mxu0 0
    %414 = vmatprep.subr.bf16.mxu0 0
    %415 = vmatpush1.bf16.msra.mxu0 0
    %416 = vmatprep.subr.bf16.mxu0 0
    %417 = vmatpush1.bf16.msra.mxu0 0
    %418 = vmatprep.subr.bf16.mxu0 0
    %419 = vmatpush1.bf16.msra.mxu0 0
    %420 = vmatprep.subr.bf16.mxu0 0
    %421 = vmatpush1.bf16.msra.mxu0 0
    %422 = vmatprep.subr.bf16.mxu0 0
    %423 = vmatpush1.bf16.msra.mxu0 0
    %424 = vmatprep.subr.bf16.mxu0 0
    %425 = vmatpush1.bf16.msra.mxu0 0
    %426 = vmatprep.subr.bf16.mxu0 0
    %427 = vmatpush1.bf16.msra.mxu0 0
    %428 = vmatprep.subr.bf16.mxu0 0
    %429 = vmatpush1.bf16.msra.mxu0 0
    %430 = vmatprep.subr.bf16.mxu0 0
    %431 = vmatpush1.bf16.msra.mxu0 0
    %432 = vmatprep.subr.bf16.mxu0 0
    %433 = vmatpush1.bf16.msra.mxu0 0
    %434 = vmatprep.subr.bf16.mxu0 0
    %435 = vmatpush1.bf16.msra.mxu0 0
    %436 = vmatprep.subr.bf16.mxu0 0
    %437 = vmatpush1.bf16.msra.mxu0 0
    %438 = vmatprep.subr.bf16.mxu0 0
    %439 = vmatpush1.bf16.msra.mxu0 0
    %440 = vmatprep.mubr.bf16.mxu0 0
    %441 = vmatmul.mubr.bf16.gmra.mrb[0].mxu0 %v403
    %v442 = vpop.f32.mrb[0].mxu0
    %v443 = vadd.f32 %v387, %v442
    %v444 = vpop.f32.mrb[0].mxu0
    %v445 = vpop.f32.mrb[0].mxu0
    %v446 = vadd.f32 %v387, %v445
    %v447 = vpop.f32.mrb[0].mxu0
    %448 = vmatprep.mubr.bf16.mxu0 0
    %449 = vmatmul.mubr.bf16.gmra.mrb[0].mxu0 %v406
    %v450 = vpop.f32.mrb[0].mxu0
    %v451 = vadd.f32 %v387, %v450
    %v452 = vpop.f32.mrb[0].mxu0
    %v453 = vpop.f32.mrb[0].mxu0
    %v454 = vpop.f32.mrb[0].mxu0
    %455 = vdwg.mxu0
    %v456 = vmax.f32 %v443, 0.0
    %v457 = vmax.f32 %v446, 0.0
    %v458 = vmax.f32 %v451, 0.0
    %v459 = vpack.c.bf16 %v457, %v456
    %v460 = vpack.c.bf16 %v458, %v458
    %v461 = vld [vmem:[%s5] sm:$0xf]
    %v462 = vld [vmem:[%s5 + $0x4] sm:$0xf]
    %v463 = vld [vmem:[%s5 + $0x8] sm:$0xf]
    %v464 = vld [vmem:[%s5 + $0xc] sm:$0xf]
    %v465 = vld [vmem:[%s6] sm:$0x1]
    %v467 = vlaneseq
    %v468 = vshrl.u32 %v467, 7
    %v469 = vsub.s32 0, %v468
    %v470 = vrot.slane %v465, %v469
    %v476 = vunpack.c.l.b16 %v461
    %v477 = vunpack.c.l.b16 %v462
    %v478 = vunpack.c.l.b16 %v463
    %v479 = vunpack.c.l.b16 %v464
    %v480 = vpack.c.b16 %v477, %v476
    %v481 = vpack.c.b16 %v479, %v478
    %v485 = vsel %vm401, %v459, 0
    %v488 = vsel %vm401, %v460, 0
    %490 = vmatprep.subr.bf16.mxu0 0
    %491 = vmatpush1.bf16.msra.mxu0 %v480
    %492 = vmatprep.subr.bf16.mxu0 0
    %493 = vmatpush1.bf16.msra.mxu0 %v481
    %494 = vmatprep.subr.bf16.mxu0 0
    %495 = vmatpush1.bf16.msra.mxu0 0
    %496 = vmatprep.subr.bf16.mxu0 0
    %497 = vmatpush1.bf16.msra.mxu0 0
    %498 = vmatprep.subr.bf16.mxu0 0
    %499 = vmatpush1.bf16.msra.mxu0 0
    %500 = vmatprep.subr.bf16.mxu0 0
    %501 = vmatpush1.bf16.msra.mxu0 0
    %502 = vmatprep.subr.bf16.mxu0 0
    %503 = vmatpush1.bf16.msra.mxu0 0
    %504 = vmatprep.subr.bf16.mxu0 0
    %505 = vmatpush1.bf16.msra.mxu0 0
    %506 = vmatprep.subr.bf16.mxu0 0
    %507 = vmatpush1.bf16.msra.mxu0 0
    %508 = vmatprep.subr.bf16.mxu0 0
    %509 = vmatpush1.bf16.msra.mxu0 0
    %510 = vmatprep.subr.bf16.mxu0 0
    %511 = vmatpush1.bf16.msra.mxu0 0
    %512 = vmatprep.subr.bf16.mxu0 0
    %513 = vmatpush1.bf16.msra.mxu0 0
    %514 = vmatprep.subr.bf16.mxu0 0
    %515 = vmatpush1.bf16.msra.mxu0 0
    %516 = vmatprep.subr.bf16.mxu0 0
    %517 = vmatpush1.bf16.msra.mxu0 0
    %518 = vmatprep.subr.bf16.mxu0 0
    %519 = vmatpush1.bf16.msra.mxu0 0
    %520 = vmatprep.subr.bf16.mxu0 0
    %521 = vmatpush1.bf16.msra.mxu0 0
    %522 = vmatprep.mubr.bf16.mxu0 0
    %523 = vmatmul.mubr.bf16.gmra.mrb[0].mxu0 %v485
    %v524 = vpop.f32.mrb[0].mxu0
    %v525 = vadd.f32 %v470, %v524
    %v526 = vpop.f32.mrb[0].mxu0
    %v527 = vpop.f32.mrb[0].mxu0
    %v528 = vadd.f32 %v470, %v527
    %v529 = vpop.f32.mrb[0].mxu0
    %530 = vmatprep.mubr.bf16.mxu0 0
    %531 = vmatmul.mubr.bf16.gmra.mrb[0].mxu0 %v488
    %v532 = vpop.f32.mrb[0].mxu0
    %v533 = vadd.f32 %v470, %v532
    %v534 = vpop.f32.mrb[0].mxu0
    %v535 = vpop.f32.mrb[0].mxu0
    %v536 = vpop.f32.mrb[0].mxu0
    %537 = vdwg.mxu0
    %v538 = vmax.f32 %v525, 0.0
    %v539 = vmax.f32 %v528, 0.0
    %v540 = vmax.f32 %v533, 0.0
    %v542 = vrot.slane %v538, 2
    %v544 = vadd.f32 %v538, %v542
    %v545 = vrot.slane %v538, 4
    %v547 = vadd.f32 %v544, %v545
    %v548 = vrot.slane %v538, 6
    %v550 = vadd.f32 %v547, %v548
    %v551 = vadd.f32 %v550, %v539
    %v553 = vrot.slane %v539, 2
    %v555 = vadd.f32 %v551, %v553
    %v556 = vrot.slane %v539, 4
    %v558 = vadd.f32 %v555, %v556
    %v559 = vrot.slane %v539, 6
    %v561 = vadd.f32 %v558, %v559
    %v562 = vadd.f32 %v561, %v540
    %v564 = vrot.slane %v540, 2
    %v566 = vadd.f32 %v562, %v564
    %v567 = vrot.slane %v540, 4
    %v569 = vadd.f32 %v566, %v567
    %v570 = vrot.slane %v540, 6
    %v572 = vadd.f32 %v569, %v570
    %v573 = vmul.f32 %v572, 0.083333336
    %v574 = vpack.c.bf16 %v573, %v573
    %v575 = vld [vmem:[%s7] sm:$0xf]
    %v576 = vld [vmem:[%s7 + $0x4] sm:$0xf]
    %v577 = vld [vmem:[%s7 + $0x8] sm:$0xf]
    %v578 = vld [vmem:[%s7 + $0xc] sm:$0xf]
    %v579 = vld [vmem:[%s8] sm:$0x1]
    %v581 = vlaneseq
    %v582 = vshrl.u32 %v581, 7
    %v583 = vsub.s32 0, %v582
    %v584 = vrot.slane %v579, %v583
    %v590 = vunpack.c.l.b16 %v575
    %v591 = vunpack.c.l.b16 %v576
    %v592 = vunpack.c.l.b16 %v577
    %v593 = vunpack.c.l.b16 %v578
    %v594 = vpack.c.b16 %v591, %v590
    %v595 = vpack.c.b16 %v593, %v592
    %v599 = vsel %vm401, %v574, 0
    %601 = vmatprep.subr.bf16.mxu0 0
    %602 = vmatpush1.bf16.msra.mxu0 %v594
    %603 = vmatprep.subr.bf16.mxu0 0
    %604 = vmatpush1.bf16.msra.mxu0 %v595
    %605 = vmatprep.subr.bf16.mxu0 0
    %606 = vmatpush1.bf16.msra.mxu0 0
    %607 = vmatprep.subr.bf16.mxu0 0
    %608 = vmatpush1.bf16.msra.mxu0 0
    %609 = vmatprep.subr.bf16.mxu0 0
    %610 = vmatpush1.bf16.msra.mxu0 0
    %611 = vmatprep.subr.bf16.mxu0 0
    %612 = vmatpush1.bf16.msra.mxu0 0
    %613 = vmatprep.subr.bf16.mxu0 0
    %614 = vmatpush1.bf16.msra.mxu0 0
    %615 = vmatprep.subr.bf16.mxu0 0
    %616 = vmatpush1.bf16.msra.mxu0 0
    %617 = vmatprep.subr.bf16.mxu0 0
    %618 = vmatpush1.bf16.msra.mxu0 0
    %619 = vmatprep.subr.bf16.mxu0 0
    %620 = vmatpush1.bf16.msra.mxu0 0
    %621 = vmatprep.subr.bf16.mxu0 0
    %622 = vmatpush1.bf16.msra.mxu0 0
    %623 = vmatprep.subr.bf16.mxu0 0
    %624 = vmatpush1.bf16.msra.mxu0 0
    %625 = vmatprep.subr.bf16.mxu0 0
    %626 = vmatpush1.bf16.msra.mxu0 0
    %627 = vmatprep.subr.bf16.mxu0 0
    %628 = vmatpush1.bf16.msra.mxu0 0
    %629 = vmatprep.subr.bf16.mxu0 0
    %630 = vmatpush1.bf16.msra.mxu0 0
    %631 = vmatprep.subr.bf16.mxu0 0
    %632 = vmatpush1.bf16.msra.mxu0 0
    %633 = vmatprep.mubr.bf16.mxu0 0
    %634 = vmatmul.mubr.bf16.gmra.mrb[0].mxu0 %v599
    %v635 = vpop.f32.mrb[0].mxu0
    %v636 = vadd.f32 %v584, %v635
    %v637 = vpop.f32.mrb[0].mxu0
    %v638 = vpop.f32.mrb[0].mxu0
    %v639 = vpop.f32.mrb[0].mxu0
    %640 = vdwg.mxu0
    %vm641 = vcmask 58368
    %642 = vst.msk [vmem:[#allocation8] sm:$0x3] %vm641, %v636
    // Predicated region
    $region46: #{tpu_custom_call.1} parent=1 // pred_check
      _
    $region47: #{tpu_custom_call.1} parent=1 // pred_check_branch
      %644 = sbr.rel (0) target = $region49
    $region48: #{tpu_custom_call.1} parent=1 // pred_region
      %s646 = ssub.s32 32, 32
      %647 = vsyncadd [#allocation5], %s646
      %s649 = sshll.u32 [#allocation8], 4
      %s650 = int_to_ptr.vmem [resolvable:$true] %s649
      %652 = dma.vmem_to_hbm [thread:$0]  %s650, 32, %s9, [#allocation5]
    $region49: #{tpu_custom_call.1} parent=1 // pred_fallthru
      _
    // Predicated region
    $region50: #{tpu_custom_call.1} parent=1 // pred_check
      _
    $region51: #{tpu_custom_call.1} parent=1 // pred_check_branch
      %654 = sbr.rel (0) target = $region53
    $region52: #{tpu_custom_call.1} parent=1 // pred_region
      %655 = dma.done [#allocation5], 32
    $region53: #{tpu_custom_call.1} parent=1 // pred_fallthru
      _
    %656 = vsyncpa [#allocation4], 1
    %657 = vsyncpa [#allocation7], 1
    %658 = vsyncpa [#allocation5], 1

</llo_original>
